<compile_context>
chip_gen: v5e
topology: v5e:2x2
jax: 0.10.0
libtpu: 0.0.40
codegen_flags: <defaults>
</compile_context>

<pallas_src>
import math
from typing import NamedTuple

import jax
import jax.numpy as jnp
from jax.experimental import pallas as pl
from jax.experimental.pallas import tpu as pltpu

_MIB = 1024 * 1024


def _round_up(v, m):
    return (v + m - 1) // m * m


# ----------------------------------------------------------------------------
# Kernel
# ----------------------------------------------------------------------------
def _gnn_kernel(adj_ref, w1_ref, w2_ref, x_ref, o_ref, h_ref):
    # adj: (Np, Np) bf16 (grid-invariant); w1: (Cin, Hp) bf16; w2: (Hp, Hp) bf16
    # x:   (Bt, Np, Cin) bf16; o: (Bt, Np, Hp); h_ref: (Bt, Np, Hp) bf16 scratch
    bt, n_p, cin = x_ref.shape
    hp = w1_ref.shape[1]
    bf16 = jnp.bfloat16

    adj = adj_ref[...]

    # ---- layer 1, weight matmul collapsed across the batch tile:
    #      one tall-M MXU sequence (Bt*Np, Cin) @ (Cin, Hp).
    x2 = x_ref[...].reshape(bt * n_p, cin)
    h0 = jnp.dot(x2, w1_ref[...], preferred_element_type=jnp.float32)
    h_ref[...] = h0.astype(bf16).reshape(bt, n_p, hp)

    # ---- layer 1, adjacency matmul + ReLU, per batch element.  Each matmul
    # has a full Hp-lane-wide output; per-iteration data lives in the VMEM
    # scratch, so the static unroll keeps vreg live ranges bounded.
    for t in range(bt):
        ht = jnp.dot(adj, h_ref[t], preferred_element_type=jnp.float32)
        h_ref[t] = jnp.maximum(ht, 0.0).astype(bf16)  # ReLU in f32, store bf16

    # ---- layer 2, weight matmul collapsed across the batch tile.
    g = jnp.dot(h_ref[...].reshape(bt * n_p, hp), w2_ref[...],
                preferred_element_type=jnp.float32)
    h_ref[...] = g.astype(bf16).reshape(bt, n_p, hp)

    # ---- layer 2, adjacency matmul, written straight to the output block.
    for t in range(bt):
        ot = jnp.dot(adj, h_ref[t], preferred_element_type=jnp.float32)
        o_ref[t] = ot.astype(o_ref.dtype)


# ----------------------------------------------------------------------------
# Generation-aware sizing helpers
# ----------------------------------------------------------------------------
def _device_kind() -> str:
    try:
        return jax.devices()[0].device_kind.lower()
    except Exception:  # pragma: no cover - defensive
        return ""


def _vmem_budget_bytes(kind: str) -> int:
    # v7x: 64 MiB VMEM per TensorCore -> stay well under.  v5e/v6e: 128 MiB.
    return 48 * _MIB if "v7" in kind else 96 * _MIB


def _step_bytes(bt, n_p, cin, hp, out_bytes):
    """Rough per-grid-step VMEM footprint (double-buffered blocks + scratch)."""
    bf = 2
    x_blk = bt * n_p * cin * bf * 2
    o_blk = bt * n_p * hp * out_bytes * 2
    adj = n_p * n_p * bf * 2
    w1 = cin * hp * bf * 2
    w2 = hp * hp * bf * 2
    scr = bt * n_p * hp * bf
    live = 3 * bt * n_p * hp * 4          # headroom for f32 matmul results
    return x_blk + o_blk + adj + w1 + w2 + scr + live


def _pick_batch_tile(b, n_p, cin, hp, out_bytes, kind, budget):
    bt = max(1, min(b, 8))                # cap the unrolled adjacency loop
    while bt > 1 and _step_bytes(bt, n_p, cin, hp, out_bytes) > budget:
        bt -= 1
    if "v7" in kind and b >= 2:
        bt = min(bt, max(1, b // 2))      # keep >=2 grid steps for the 2 TCs
    return bt


# ----------------------------------------------------------------------------
# Parameters (padded/cast once, outside the per-call hot path)
# ----------------------------------------------------------------------------
class GNNParams(NamedTuple):
    adj: jax.Array   # (Np, Np) bf16
    w1: jax.Array    # (Cin, Hp) bf16
    w2: jax.Array    # (Hp, Hp) bf16
    n: int           # logical N
    h: int           # logical hidden


def prepare_gnn_params(adj_normed, w1, w2) -> GNNParams:
    n = adj_normed.shape[0]
    cin, h = w1.shape
    n_p = _round_up(n, 128)    # lane-dense adj tiles, full MXU-K, bf16 sublanes
    hp = _round_up(h, 128)
    bf16 = jnp.bfloat16
    # NOTE: adj is kept in bf16 for MXU speed; keep it f32 if accuracy on very
    # large graphs matters (see correctness notes).
    adjp = jnp.zeros((n_p, n_p), bf16).at[:n, :n].set(adj_normed.astype(bf16))
    w1p = jnp.zeros((cin, hp), bf16).at[:, :h].set(w1.astype(bf16))
    w2p = jnp.zeros((hp, hp), bf16).at[:h, :h].set(w2.astype(bf16))
    return GNNParams(adj=adjp, w1=w1p, w2=w2p, n=n, h=h)


# ----------------------------------------------------------------------------
# Forward wrapper
# ----------------------------------------------------------------------------
def gnn_forward(x, params: GNNParams, *, batch_tile=None, out_dtype=jnp.float32):
    """x: (B, N, Cin) f32/bf16 -> (B, N, H) out_dtype."""
    b, n, cin = x.shape
    n_p = params.adj.shape[0]
    hp = params.w1.shape[1]
    assert n == params.n and cin == params.w1.shape[0]

    kind = _device_kind()
    budget = _vmem_budget_bytes(kind)
    out_bytes = jnp.dtype(out_dtype).itemsize

    if batch_tile is None:
        batch_tile = _pick_batch_tile(b, n_p, cin, hp, out_bytes, kind, budget)
    bt = max(1, int(batch_tile))
    bp = _round_up(b, bt)

    bf16 = jnp.bfloat16
    if (b, n) == (bp, n_p) and x.dtype == bf16:
        xp = x                                           # already aligned
    else:
        xp = jnp.zeros((bp, n_p, cin), bf16).at[:b, :n, :].set(x.astype(bf16))

    step = _step_bytes(bt, n_p, cin, hp, out_bytes)
    vmem_limit = int(min(budget, max(32 * _MIB, 2 * step)))

    # Advisory cost estimate on logical shapes.
    h_log = params.h
    flops = 2 * b * n * (cin * h_log + n * h_log + h_log * h_log + n * h_log)
    bytes_accessed = int(xp.size * 2 + params.adj.size * 2 + params.w1.size * 2
                         + params.w2.size * 2 + bp * n_p * hp * out_bytes)

    out_p = pl.pallas_call(
        _gnn_kernel,
        out_shape=jax.ShapeDtypeStruct((bp, n_p, hp), out_dtype),
        grid_spec=pltpu.PrefetchScalarGridSpec(
            num_scalar_prefetch=0,
            grid=(bp // bt,),
            in_specs=[
                pl.BlockSpec((n_p, n_p), lambda i: (0, 0)),       # adj (shared)
                pl.BlockSpec((cin, hp), lambda i: (0, 0)),        # W1 (shared)
                pl.BlockSpec((hp, hp), lambda i: (0, 0)),         # W2 (shared)
                pl.BlockSpec((bt, n_p, cin), lambda i: (i, 0, 0)),  # x per tile
            ],
            out_specs=pl.BlockSpec((bt, n_p, hp), lambda i: (i, 0, 0)),
            scratch_shapes=[pltpu.VMEM((bt, n_p, hp), bf16)],
        ),
        compiler_params=pltpu.CompilerParams(
            dimension_semantics=("parallel",),
            vmem_limit_bytes=vmem_limit,
        ),
        cost_estimate=pl.CostEstimate(
            flops=int(flops), transcendentals=0, bytes_accessed=bytes_accessed),
    )(params.adj, params.w1, params.w2, xp)

    return out_p[:b, :n, :params.h]


# ----------------------------------------------------------------------------
# Module-equivalent helpers + references
# ----------------------------------------------------------------------------
def normalize_adj(a):
    """As in the reference (self_loop=True path):
       A <- A.T; D_inv = 1/rowsum(A); return diag(D_inv) @ A.
       (Rows must have nonzero degree, e.g. self-loops present.)"""
    a = a.T
    d_row_sum = a.sum(axis=1)
    d_inv = 1.0 / d_row_sum
    return d_inv[:, None] * a


def init_params(key, in_channels, hidden_channels):
    k1, k2 = jax.random.split(key)
    stdv = 1.0 / math.sqrt(hidden_channels)
    w1 = jax.random.uniform(k1, (in_channels, hidden_channels),
                            minval=-stdv, maxval=stdv, dtype=jnp.float32)
    w2 = jax.random.uniform(k2, (hidden_channels, hidden_channels),
                            minval=-stdv, maxval=stdv, dtype=jnp.float32)
    return w1, w2


def reference_forward_f32(x, adj, w1, w2):
    """Exact f32 reference matching the PyTorch module."""
    h = jnp.einsum("nk,bkh->bnh", adj,
                   jnp.einsum("bni,ih->bnh", x, w1, precision="highest"),
                   precision="highest")
    h = jnp.maximum(h, 0.0)
    return jnp.einsum("nk,bkm->bnm", adj,
                      jnp.einsum("bnh,hm->bnm", h, w2, precision="highest"),
                      precision="highest")


def reference_forward_bf16(x, adj, w1, w2):
    """Matched-precision reference: bf16 operands, f32 accumulation, identical
       op/association order to the kernel."""
    bf16 = jnp.bfloat16
    xb, ab, w1b, w2b = (t.astype(bf16) for t in (x, adj, w1, w2))
    h0 = jnp.einsum("bni,ih->bnh", xb, w1b,
                    preferred_element_type=jnp.float32).astype(bf16)
    h = jnp.einsum("nk,bkh->bnh", ab, h0, preferred_element_type=jnp.float32)
    h = jnp.maximum(h, 0.0).astype(bf16)
    g = jnp.einsum("bnh,hm->bnm", h, w2b,
                   preferred_element_type=jnp.float32).astype(bf16)
    return jnp.einsum("nk,bkm->bnm", ab, g, preferred_element_type=jnp.float32)


# ----------------------------------------------------------------------------
if __name__ == "__main__":
    key = jax.random.PRNGKey(0)
    k_adj, k_x, k_w = jax.random.split(key, 3)

    B, N, Cin, Hid = 2, 16, 8, 32

    # Adjacency with self-loops (positive entries -> nonzero row sums).
    adj_bin = (jax.random.uniform(k_adj, (N, N)) > 0.6).astype(jnp.float32)
    adj = adj_bin + jnp.eye(N, dtype=jnp.float32)
    adj_normed = normalize_adj(adj)

    w1, w2 = init_params(k_w, Cin, Hid)
    x = jax.random.normal(k_x, (B, N, Cin), dtype=jnp.float32)

    params = prepare_gnn_params(adj_normed, w1, w2)   # pad/cast once
    fwd = jax.jit(lambda xx: gnn_forward(xx, params))

    out = jax.block_until_ready(fwd(x))
    assert out.shape == (B, N, Hid)
    assert bool(jnp.all(jnp.isfinite(out)))

    # Tight check vs the matched-precision (bf16-in / f32-acc) reference.
    ref_bf16 = reference_forward_bf16(x, adj_normed, w1, w2)
    assert jnp.allclose(out, ref_bf16, atol=1e-2, rtol=1e-2), \
        "mismatch vs bf16 reference"

    # Loose sanity check vs the exact f32 module semantics.
    ref_f32 = reference_forward_f32(x, adj_normed, w1, w2)
    assert jnp.allclose(out, ref_f32, atol=1e-1, rtol=1e-1), \
        "mismatch vs f32 reference"

    print("KERNEL_OK")
</pallas_src>

<mosaic_0001>
module attributes {stable_mosaic.version = 11 : i64} {
  func.func @_gnn_kernel(%arg0: i32, %arg1: memref<128x128xbf16, #tpu.memory_space<vmem>>, %arg2: memref<8x128xbf16, #tpu.memory_space<vmem>>, %arg3: memref<128x128xbf16, #tpu.memory_space<vmem>>, %arg4: memref<2x128x8xbf16, #tpu.memory_space<vmem>>, %arg5: memref<2x128x128xf32, #tpu.memory_space<vmem>>, %arg6: memref<2x128x128xbf16, #tpu.memory_space<vmem>>) attributes {dimension_semantics = [#tpu.dimension_semantics<parallel>], iteration_bounds = array<i64: 1>, scalar_prefetch = 0 : i64, scratch_operands = 1 : i64, tpu.core_type = #tpu.core_type<tc>, window_params = [{pipeline_mode = #tpu.pipeline_mode<synchronous>, transform_indices = @transform_0, window_bounds = array<i64: 128, 128>}, {pipeline_mode = #tpu.pipeline_mode<synchronous>, transform_indices = @transform_1, window_bounds = array<i64: 8, 128>}, {pipeline_mode = #tpu.pipeline_mode<synchronous>, transform_indices = @transform_2, window_bounds = array<i64: 128, 128>}, {transform_indices = @transform_3, window_bounds = array<i64: 2, 128, 8>}, {transform_indices = @transform_4, window_bounds = array<i64: 2, 128, 128>}]} {
    %c0 = arith.constant 0 : index
    %c0_0 = arith.constant 0 : index
    %0 = vector.load %arg1[%c0, %c0_0] : memref<128x128xbf16, #tpu.memory_space<vmem>>, vector<128x128xbf16>
    %c0_1 = arith.constant 0 : index
    %c0_2 = arith.constant 0 : index
    %c0_3 = arith.constant 0 : index
    %1 = vector.load %arg4[%c0_1, %c0_2, %c0_3] : memref<2x128x8xbf16, #tpu.memory_space<vmem>>, vector<2x128x8xbf16>
    %2 = vector.shape_cast %1 : vector<2x128x8xbf16> to vector<256x8xbf16>
    %c0_4 = arith.constant 0 : index
    %c0_5 = arith.constant 0 : index
    %3 = vector.load %arg2[%c0_4, %c0_5] : memref<8x128xbf16, #tpu.memory_space<vmem>>, vector<8x128xbf16>
    %cst = arith.constant dense<0.000000e+00> : vector<256x128xf32>
    %4 = tpu.matmul %2, %3, %cst {dimension_numbers = #tpu.dot_dimension_numbers<[1], [0], [0], [1], [0, 0, 1, 1], [], []>} : vector<256x8xbf16>, vector<8x128xbf16>, vector<256x128xf32> -> vector<256x128xf32>
    %5 = arith.truncf %4 : vector<256x128xf32> to vector<256x128xbf16>
    %6 = vector.shape_cast %5 : vector<256x128xbf16> to vector<2x128x128xbf16>
    %c0_6 = arith.constant 0 : index
    %c0_7 = arith.constant 0 : index
    %c0_8 = arith.constant 0 : index
    %7 = vector.load %arg6[%c0_6, %c0_7, %c0_8] : memref<2x128x128xbf16, #tpu.memory_space<vmem>>, vector<2x128x128xbf16>
    tpu.vector_store %arg6[%c0_6, %c0_7, %c0_8], %6 {strides = array<i32>} : memref<2x128x128xbf16, #tpu.memory_space<vmem>>, vector<2x128x128xbf16>,
    %c0_9 = arith.constant 0 : index
    %c0_10 = arith.constant 0 : index
    %c0_11 = arith.constant 0 : index
    %8 = vector.load %arg6[%c0_9, %c0_10, %c0_11] : memref<2x128x128xbf16, #tpu.memory_space<vmem>>, vector<1x128x128xbf16>
    %9 = vector.shape_cast %8 : vector<1x128x128xbf16> to vector<128x128xbf16>
    %cst_12 = arith.constant dense<0.000000e+00> : vector<128x128xf32>
    %10 = tpu.matmul %0, %9, %cst_12 {dimension_numbers = #tpu.dot_dimension_numbers<[1], [0], [0], [1], [0, 0, 1, 1], [], []>} : vector<128x128xbf16>, vector<128x128xbf16>, vector<128x128xf32> -> vector<128x128xf32>
    %cst_13 = arith.constant 0.000000e+00 : f32
    %11 = vector.broadcast %cst_13 : f32 to vector<128x128xf32>
    %12 = arith.maximumf %10, %11 : vector<128x128xf32>
    %13 = arith.truncf %12 : vector<128x128xf32> to vector<128x128xbf16>
    %c0_14 = arith.constant 0 : index
    %c0_15 = arith.constant 0 : index
    %c0_16 = arith.constant 0 : index
    %14 = vector.load %arg6[%c0_14, %c0_15, %c0_16] : memref<2x128x128xbf16, #tpu.memory_space<vmem>>, vector<1x128x128xbf16>
    %15 = vector.shape_cast %14 : vector<1x128x128xbf16> to vector<128x128xbf16>
    %16 = vector.shape_cast %13 : vector<128x128xbf16> to vector<1x128x128xbf16>
    tpu.vector_store %arg6[%c0_14, %c0_15, %c0_16], %16 {strides = array<i32>} : memref<2x128x128xbf16, #tpu.memory_space<vmem>>, vector<1x128x128xbf16>,
    %c1 = arith.constant 1 : index
    %c0_17 = arith.constant 0 : index
    %c0_18 = arith.constant 0 : index
    %17 = vector.load %arg6[%c1, %c0_17, %c0_18] : memref<2x128x128xbf16, #tpu.memory_space<vmem>>, vector<1x128x128xbf16>
    %18 = vector.shape_cast %17 : vector<1x128x128xbf16> to vector<128x128xbf16>
    %cst_19 = arith.constant dense<0.000000e+00> : vector<128x128xf32>
    %19 = tpu.matmul %0, %18, %cst_19 {dimension_numbers = #tpu.dot_dimension_numbers<[1], [0], [0], [1], [0, 0, 1, 1], [], []>} : vector<128x128xbf16>, vector<128x128xbf16>, vector<128x128xf32> -> vector<128x128xf32>
    %cst_20 = arith.constant 0.000000e+00 : f32
    %20 = vector.broadcast %cst_20 : f32 to vector<128x128xf32>
    %21 = arith.maximumf %19, %20 : vector<128x128xf32>
    %22 = arith.truncf %21 : vector<128x128xf32> to vector<128x128xbf16>
    %c1_21 = arith.constant 1 : index
    %c0_22 = arith.constant 0 : index
    %c0_23 = arith.constant 0 : index
    %23 = vector.load %arg6[%c1_21, %c0_22, %c0_23] : memref<2x128x128xbf16, #tpu.memory_space<vmem>>, vector<1x128x128xbf16>
    %24 = vector.shape_cast %23 : vector<1x128x128xbf16> to vector<128x128xbf16>
    %25 = vector.shape_cast %22 : vector<128x128xbf16> to vector<1x128x128xbf16>
    tpu.vector_store %arg6[%c1_21, %c0_22, %c0_23], %25 {strides = array<i32>} : memref<2x128x128xbf16, #tpu.memory_space<vmem>>, vector<1x128x128xbf16>,
    %c0_24 = arith.constant 0 : index
    %c0_25 = arith.constant 0 : index
    %c0_26 = arith.constant 0 : index
    %26 = vector.load %arg6[%c0_24, %c0_25, %c0_26] : memref<2x128x128xbf16, #tpu.memory_space<vmem>>, vector<2x128x128xbf16>
    %27 = vector.shape_cast %26 : vector<2x128x128xbf16> to vector<256x128xbf16>
    %c0_27 = arith.constant 0 : index
    %c0_28 = arith.constant 0 : index
    %28 = vector.load %arg3[%c0_27, %c0_28] : memref<128x128xbf16, #tpu.memory_space<vmem>>, vector<128x128xbf16>
    %cst_29 = arith.constant dense<0.000000e+00> : vector<256x128xf32>
    %29 = tpu.matmul %27, %28, %cst_29 {dimension_numbers = #tpu.dot_dimension_numbers<[1], [0], [0], [1], [0, 0, 1, 1], [], []>} : vector<256x128xbf16>, vector<128x128xbf16>, vector<256x128xf32> -> vector<256x128xf32>
    %30 = arith.truncf %29 : vector<256x128xf32> to vector<256x128xbf16>
    %31 = vector.shape_cast %30 : vector<256x128xbf16> to vector<2x128x128xbf16>
    %c0_30 = arith.constant 0 : index
    %c0_31 = arith.constant 0 : index
    %c0_32 = arith.constant 0 : index
    %32 = vector.load %arg6[%c0_30, %c0_31, %c0_32] : memref<2x128x128xbf16, #tpu.memory_space<vmem>>, vector<2x128x128xbf16>
    tpu.vector_store %arg6[%c0_30, %c0_31, %c0_32], %31 {strides = array<i32>} : memref<2x128x128xbf16, #tpu.memory_space<vmem>>, vector<2x128x128xbf16>,
    %c0_33 = arith.constant 0 : index
    %c0_34 = arith.constant 0 : index
    %c0_35 = arith.constant 0 : index
    %33 = vector.load %arg6[%c0_33, %c0_34, %c0_35] : memref<2x128x128xbf16, #tpu.memory_space<vmem>>, vector<1x128x128xbf16>
    %34 = vector.shape_cast %33 : vector<1x128x128xbf16> to vector<128x128xbf16>
    %cst_36 = arith.constant dense<0.000000e+00> : vector<128x128xf32>
    %35 = tpu.matmul %0, %34, %cst_36 {dimension_numbers = #tpu.dot_dimension_numbers<[1], [0], [0], [1], [0, 0, 1, 1], [], []>} : vector<128x128xbf16>, vector<128x128xbf16>, vector<128x128xf32> -> vector<128x128xf32>
    %c0_37 = arith.constant 0 : index
    %c0_38 = arith.constant 0 : index
    %c0_39 = arith.constant 0 : index
    %36 = vector.load %arg5[%c0_37, %c0_38, %c0_39] : memref<2x128x128xf32, #tpu.memory_space<vmem>>, vector<1x128x128xf32>
    %37 = vector.shape_cast %36 : vector<1x128x128xf32> to vector<128x128xf32>
    %38 = vector.shape_cast %35 : vector<128x128xf32> to vector<1x128x128xf32>
    tpu.vector_store %arg5[%c0_37, %c0_38, %c0_39], %38 {strides = array<i32>} : memref<2x128x128xf32, #tpu.memory_space<vmem>>, vector<1x128x128xf32>,
    %c1_40 = arith.constant 1 : index
    %c0_41 = arith.constant 0 : index
    %c0_42 = arith.constant 0 : index
    %39 = vector.load %arg6[%c1_40, %c0_41, %c0_42] : memref<2x128x128xbf16, #tpu.memory_space<vmem>>, vector<1x128x128xbf16>
    %40 = vector.shape_cast %39 : vector<1x128x128xbf16> to vector<128x128xbf16>
    %cst_43 = arith.constant dense<0.000000e+00> : vector<128x128xf32>
    %41 = tpu.matmul %0, %40, %cst_43 {dimension_numbers = #tpu.dot_dimension_numbers<[1], [0], [0], [1], [0, 0, 1, 1], [], []>} : vector<128x128xbf16>, vector<128x128xbf16>, vector<128x128xf32> -> vector<128x128xf32>
    %c1_44 = arith.constant 1 : index
    %c0_45 = arith.constant 0 : index
    %c0_46 = arith.constant 0 : index
    %42 = vector.load %arg5[%c1_44, %c0_45, %c0_46] : memref<2x128x128xf32, #tpu.memory_space<vmem>>, vector<1x128x128xf32>
    %43 = vector.shape_cast %42 : vector<1x128x128xf32> to vector<128x128xf32>
    %44 = vector.shape_cast %41 : vector<128x128xf32> to vector<1x128x128xf32>
    tpu.vector_store %arg5[%c1_44, %c0_45, %c0_46], %44 {strides = array<i32>} : memref<2x128x128xf32, #tpu.memory_space<vmem>>, vector<1x128x128xf32>,
    return
  }
  func.func @transform_0(%arg0: i32) -> (i32, i32) {
    %c0_i32 = arith.constant 0 : i32
    %c0_i32_0 = arith.constant 0 : i32
    %c0_i32_1 = arith.constant 0 : i32
    return %c0_i32, %c0_i32_0 : i32, i32
  }
  func.func @transform_1(%arg0: i32) -> (i32, i32) {
    %c0_i32 = arith.constant 0 : i32
    %c0_i32_0 = arith.constant 0 : i32
    %c0_i32_1 = arith.constant 0 : i32
    return %c0_i32, %c0_i32_0 : i32, i32
  }
  func.func @transform_2(%arg0: i32) -> (i32, i32) {
    %c0_i32 = arith.constant 0 : i32
    %c0_i32_0 = arith.constant 0 : i32
    %c0_i32_1 = arith.constant 0 : i32
    return %c0_i32, %c0_i32_0 : i32, i32
  }
  func.func @transform_3(%arg0: i32) -> (i32, i32, i32) {
    %c0_i32 = arith.constant 0 : i32
    %c0_i32_0 = arith.constant 0 : i32
    %c0_i32_1 = arith.constant 0 : i32
    return %arg0, %c0_i32, %c0_i32_0 : i32, i32, i32
  }
  func.func @transform_4(%arg0: i32) -> (i32, i32, i32) {
    %c0_i32 = arith.constant 0 : i32
    %c0_i32_0 = arith.constant 0 : i32
    %c0_i32_1 = arith.constant 0 : i32
    return %arg0, %c0_i32, %c0_i32_0 : i32, i32, i32
  }
}

</mosaic_0001>

<llo_original>
// kernel: _lambda_.1
$region0: #{_lambda_.1}
  #allocation0 [shape = 'u32[]', space=smem, size = 0x4, offset = 0x4, fixed_abs, tag = 'smem constant byte address 0x4 - core index']
  #allocation1 [shape = 'u32[72,128]{1,0:T(1,128)}', space=vmem, size = 0x9000, scoped, tag = 'internal scratch']
  #allocation2 [shape = 'bf16[2,128,128]{2,1,0:T(8,128)(2,1)}', space=vmem, size = 0x10000, scoped, tag = 'scratch operand']
  %s0 = inlined_call_operand.vmem [shape: bf16[128,128], index: 0, kind: input, shape index: {}]
  %s1 = inlined_call_operand.vmem [shape: bf16[8,128], index: 1, kind: input, shape index: {}]
  %s2 = inlined_call_operand.vmem [shape: bf16[128,128], index: 2, kind: input, shape index: {}]
  %s3 = inlined_call_operand.vmem [shape: bf16[2,128,8], index: 3, kind: input, shape index: {}]
  %s4 = inlined_call_operand.vmem [shape: f32[2,128,128], index: 4, kind: output, shape index: {}]
  %s5 = sld [smem:[#allocation0]]
  $region26: #{_lambda_.1} parent=0
    _
  %s7 = ssub.s32 1, %s5
  %s8 = scalar_select 0, %s7, %s5
  // Predicated region
  $region2: #{_lambda_.1} parent=0 // pred_check
    _
  $region3: #{_lambda_.1} parent=0 // pred_check_branch
    %10 = sbr.rel (0) target = $region5
  $region4: #{_lambda_.1} parent=0 // pred_region
    _
  $region5: #{_lambda_.1} parent=0 // pred_fallthru
    _
  // Predicated region
  $region6: #{_lambda_.1} parent=0 // pred_check
    _
  $region7: #{_lambda_.1} parent=0 // pred_check_branch
    %12 = sbr.rel (0) target = $region9
  $region8: #{_lambda_.1} parent=0 // pred_region
    _
  $region9: #{_lambda_.1} parent=0 // pred_fallthru
    _
  // Predicated region
  $region10: #{_lambda_.1} parent=0 // pred_check
    _
  $region11: #{_lambda_.1} parent=0 // pred_check_branch
    %14 = sbr.rel (0) target = $region13
  $region12: #{_lambda_.1} parent=0 // pred_region
    _
  $region13: #{_lambda_.1} parent=0 // pred_fallthru
    _
  // Predicated region
  $region14: #{_lambda_.1} parent=0 // pred_check
    _
  $region15: #{_lambda_.1} parent=0 // pred_check_branch
    %16 = sbr.rel (0) target = $region17
  $region16: #{_lambda_.1} parent=0 // pred_region
    _
  $region17: #{_lambda_.1} parent=0 // pred_fallthru
    _
  %v18 = vld [vmem:[%s0] sm:$0xf]
  %v19 = vld [vmem:[%s0 + $0x4] sm:$0xf]
  %v20 = vld [vmem:[%s0 + $0x8] sm:$0xf]
  %v21 = vld [vmem:[%s0 + $0xc] sm:$0xf]
  %v22 = vld [vmem:[%s0 + $0x10] sm:$0xf]
  %v23 = vld [vmem:[%s0 + $0x14] sm:$0xf]
  %v24 = vld [vmem:[%s0 + $0x18] sm:$0xf]
  %v25 = vld [vmem:[%s0 + $0x1c] sm:$0xf]
  %v26 = vld [vmem:[%s0 + $0x20] sm:$0xf]
  %v27 = vld [vmem:[%s0 + $0x24] sm:$0xf]
  %v28 = vld [vmem:[%s0 + $0x28] sm:$0xf]
  %v29 = vld [vmem:[%s0 + $0x2c] sm:$0xf]
  %v30 = vld [vmem:[%s0 + $0x30] sm:$0xf]
  %v31 = vld [vmem:[%s0 + $0x34] sm:$0xf]
  %v32 = vld [vmem:[%s0 + $0x38] sm:$0xf]
  %v33 = vld [vmem:[%s0 + $0x3c] sm:$0xf]
  %v34 = vld [vmem:[%s3] sm:$0xf]
  %v35 = vld [vmem:[%s3 + $0x4] sm:$0xf]
  %v36 = vld [vmem:[%s3 + $0x8] sm:$0xf]
  %v37 = vld [vmem:[%s3 + $0xc] sm:$0xf]
  %v38 = vld [vmem:[%s3 + $0x10] sm:$0xf]
  %v39 = vld [vmem:[%s3 + $0x14] sm:$0xf]
  %v40 = vld [vmem:[%s3 + $0x18] sm:$0xf]
  %v41 = vld [vmem:[%s3 + $0x1c] sm:$0xf]
  %v42 = vld [vmem:[%s3 + $0x20] sm:$0xf]
  %v43 = vld [vmem:[%s3 + $0x24] sm:$0xf]
  %v44 = vld [vmem:[%s3 + $0x28] sm:$0xf]
  %v45 = vld [vmem:[%s3 + $0x2c] sm:$0xf]
  %v46 = vld [vmem:[%s3 + $0x30] sm:$0xf]
  %v47 = vld [vmem:[%s3 + $0x34] sm:$0xf]
  %v48 = vld [vmem:[%s3 + $0x38] sm:$0xf]
  %v49 = vld [vmem:[%s3 + $0x3c] sm:$0xf]
  %v50 = vld [vmem:[%s3 + $0x40] sm:$0xf]
  %v51 = vld [vmem:[%s3 + $0x44] sm:$0xf]
  %v52 = vld [vmem:[%s3 + $0x48] sm:$0xf]
  %v53 = vld [vmem:[%s3 + $0x4c] sm:$0xf]
  %v54 = vld [vmem:[%s3 + $0x50] sm:$0xf]
  %v55 = vld [vmem:[%s3 + $0x54] sm:$0xf]
  %v56 = vld [vmem:[%s3 + $0x58] sm:$0xf]
  %v57 = vld [vmem:[%s3 + $0x5c] sm:$0xf]
  %v58 = vld [vmem:[%s3 + $0x60] sm:$0xf]
  %v59 = vld [vmem:[%s3 + $0x64] sm:$0xf]
  %v60 = vld [vmem:[%s3 + $0x68] sm:$0xf]
  %v61 = vld [vmem:[%s3 + $0x6c] sm:$0xf]
  %v62 = vld [vmem:[%s3 + $0x70] sm:$0xf]
  %v63 = vld [vmem:[%s3 + $0x74] sm:$0xf]
  %v64 = vld [vmem:[%s3 + $0x78] sm:$0xf]
  %v65 = vld [vmem:[%s3 + $0x7c] sm:$0xf]
  %v66 = vld [vmem:[%s1] sm:$0xf]
  %v99 = vunpack.c.l.b16 %v34
  %v100 = vunpack.c.l.b16 %v35
  %v101 = vunpack.c.l.b16 %v36
  %v102 = vunpack.c.l.b16 %v37
  %v103 = vunpack.c.l.b16 %v38
  %v104 = vunpack.c.l.b16 %v39
  %v105 = vunpack.c.l.b16 %v40
  %v106 = vunpack.c.l.b16 %v41
  %v107 = vunpack.c.l.b16 %v42
  %v108 = vunpack.c.l.b16 %v43
  %v109 = vunpack.c.l.b16 %v44
  %v110 = vunpack.c.l.b16 %v45
  %v111 = vunpack.c.l.b16 %v46
  %v112 = vunpack.c.l.b16 %v47
  %v113 = vunpack.c.l.b16 %v48
  %v114 = vunpack.c.l.b16 %v49
  %v115 = vunpack.c.l.b16 %v50
  %v116 = vunpack.c.l.b16 %v51
  %v117 = vunpack.c.l.b16 %v52
  %v118 = vunpack.c.l.b16 %v53
  %v119 = vunpack.c.l.b16 %v54
  %v120 = vunpack.c.l.b16 %v55
  %v121 = vunpack.c.l.b16 %v56
  %v122 = vunpack.c.l.b16 %v57
  %v123 = vunpack.c.l.b16 %v58
  %v124 = vunpack.c.l.b16 %v59
  %v125 = vunpack.c.l.b16 %v60
  %v126 = vunpack.c.l.b16 %v61
  %v127 = vunpack.c.l.b16 %v62
  %v128 = vunpack.c.l.b16 %v63
  %v129 = vunpack.c.l.b16 %v64
  %v130 = vunpack.c.l.b16 %v65
  %v131 = vpack.c.b16 %v100, %v99
  %v132 = vpack.c.b16 %v102, %v101
  %v133 = vpack.c.b16 %v104, %v103
  %v134 = vpack.c.b16 %v106, %v105
  %v135 = vpack.c.b16 %v108, %v107
  %v136 = vpack.c.b16 %v110, %v109
  %v137 = vpack.c.b16 %v112, %v111
  %v138 = vpack.c.b16 %v114, %v113
  %v139 = vpack.c.b16 %v116, %v115
  %v140 = vpack.c.b16 %v118, %v117
  %v141 = vpack.c.b16 %v120, %v119
  %v142 = vpack.c.b16 %v122, %v121
  %v143 = vpack.c.b16 %v124, %v123
  %v144 = vpack.c.b16 %v126, %v125
  %v145 = vpack.c.b16 %v128, %v127
  %v146 = vpack.c.b16 %v130, %v129
  %vm147 = vcmask 64512
  %v149 = vsel %vm147, %v131, 0
  %v152 = vsel %vm147, %v132, 0
  %v155 = vsel %vm147, %v133, 0
  %v158 = vsel %vm147, %v134, 0
  %v161 = vsel %vm147, %v135, 0
  %v164 = vsel %vm147, %v136, 0
  %v167 = vsel %vm147, %v137, 0
  %v170 = vsel %vm147, %v138, 0
  %v173 = vsel %vm147, %v139, 0
  %v176 = vsel %vm147, %v140, 0
  %v179 = vsel %vm147, %v141, 0
  %v182 = vsel %vm147, %v142, 0
  %v185 = vsel %vm147, %v143, 0
  %v188 = vsel %vm147, %v144, 0
  %v191 = vsel %vm147, %v145, 0
  %v194 = vsel %vm147, %v146, 0
  %vm196 = vcmask 1043456
  %v198 = vsel %vm196, %v66, 0
  %200 = vmatpush.bf16.msra.mxu0 0
  %201 = vmatpush.bf16.msra.mxu0 0
  %202 = vmatpush.bf16.msra.mxu0 0
  %203 = vmatpush.bf16.msra.mxu0 0
  %204 = vmatpush.bf16.msra.mxu0 0
  %205 = vmatpush.bf16.msra.mxu0 0
  %206 = vmatpush.bf16.msra.mxu0 0
  %207 = vmatpush.bf16.msra.mxu0 %v198
  %208 = vmatmul.bf16.gmra.mxu0 %v149
  %v209 = vpop.f32.mrf.mxu0
  %v210 = vadd.f32 0.0, %v209
  %v211 = vpop.f32.mrf.mxu0
  %v212 = vadd.f32 0.0, %v211
  %213 = vmatmul.bf16.gmra.mxu0 %v152
  %v214 = vpop.f32.mrf.mxu0
  %v215 = vadd.f32 0.0, %v214
  %v216 = vpop.f32.mrf.mxu0
  %v217 = vadd.f32 0.0, %v216
  %218 = vmatmul.bf16.gmra.mxu0 %v155
  %v219 = vpop.f32.mrf.mxu0
  %v220 = vadd.f32 0.0, %v219
  %v221 = vpop.f32.mrf.mxu0
  %v222 = vadd.f32 0.0, %v221
  %223 = vmatmul.bf16.gmra.mxu0 %v158
  %v224 = vpop.f32.mrf.mxu0
  %v225 = vadd.f32 0.0, %v224
  %v226 = vpop.f32.mrf.mxu0
  %v227 = vadd.f32 0.0, %v226
  %228 = vmatmul.bf16.gmra.mxu0 %v161
  %v229 = vpop.f32.mrf.mxu0
  %v230 = vadd.f32 0.0, %v229
  %v231 = vpop.f32.mrf.mxu0
  %v232 = vadd.f32 0.0, %v231
  %233 = vmatmul.bf16.gmra.mxu0 %v164
  %v234 = vpop.f32.mrf.mxu0
  %v235 = vadd.f32 0.0, %v234
  %v236 = vpop.f32.mrf.mxu0
  %v237 = vadd.f32 0.0, %v236
  %238 = vmatmul.bf16.gmra.mxu0 %v167
  %v239 = vpop.f32.mrf.mxu0
  %v240 = vadd.f32 0.0, %v239
  %v241 = vpop.f32.mrf.mxu0
  %v242 = vadd.f32 0.0, %v241
  %243 = vmatmul.bf16.gmra.mxu0 %v170
  %v244 = vpop.f32.mrf.mxu0
  %v245 = vadd.f32 0.0, %v244
  %v246 = vpop.f32.mrf.mxu0
  %v247 = vadd.f32 0.0, %v246
  %248 = vmatmul.bf16.gmra.mxu0 %v173
  %v249 = vpop.f32.mrf.mxu0
  %v250 = vadd.f32 0.0, %v249
  %v251 = vpop.f32.mrf.mxu0
  %v252 = vadd.f32 0.0, %v251
  %253 = vmatmul.bf16.gmra.mxu0 %v176
  %v254 = vpop.f32.mrf.mxu0
  %v255 = vadd.f32 0.0, %v254
  %v256 = vpop.f32.mrf.mxu0
  %v257 = vadd.f32 0.0, %v256
  %258 = vmatmul.bf16.gmra.mxu0 %v179
  %v259 = vpop.f32.mrf.mxu0
  %v260 = vadd.f32 0.0, %v259
  %v261 = vpop.f32.mrf.mxu0
  %v262 = vadd.f32 0.0, %v261
  %263 = vmatmul.bf16.gmra.mxu0 %v182
  %v264 = vpop.f32.mrf.mxu0
  %v265 = vadd.f32 0.0, %v264
  %v266 = vpop.f32.mrf.mxu0
  %v267 = vadd.f32 0.0, %v266
  %268 = vmatmul.bf16.gmra.mxu0 %v185
  %v269 = vpop.f32.mrf.mxu0
  %v270 = vadd.f32 0.0, %v269
  %v271 = vpop.f32.mrf.mxu0
  %v272 = vadd.f32 0.0, %v271
  %273 = vmatmul.bf16.gmra.mxu0 %v188
  %v274 = vpop.f32.mrf.mxu0
  %v275 = vadd.f32 0.0, %v274
  %v276 = vpop.f32.mrf.mxu0
  %v277 = vadd.f32 0.0, %v276
  %278 = vmatmul.bf16.gmra.mxu0 %v191
  %v279 = vpop.f32.mrf.mxu0
  %v280 = vadd.f32 0.0, %v279
  %v281 = vpop.f32.mrf.mxu0
  %v282 = vadd.f32 0.0, %v281
  %283 = vmatmul.bf16.gmra.mxu0 %v194
  %v284 = vpop.f32.mrf.mxu0
  %v285 = vadd.f32 0.0, %v284
  %v286 = vpop.f32.mrf.mxu0
  %v287 = vadd.f32 0.0, %v286
  %288 = vdwg.mxu0
  %v289 = vpack.c.bf16 %v210, %v210
  %v290 = vpack.c.bf16 %v212, %v212
  %v291 = vpack.c.bf16 %v215, %v215
  %v292 = vpack.c.bf16 %v217, %v217
  %v293 = vpack.c.bf16 %v220, %v220
  %v294 = vpack.c.bf16 %v222, %v222
  %v295 = vpack.c.bf16 %v225, %v225
  %v296 = vpack.c.bf16 %v227, %v227
  %v297 = vpack.c.bf16 %v230, %v230
  %v298 = vpack.c.bf16 %v232, %v232
  %v299 = vpack.c.bf16 %v235, %v235
  %v300 = vpack.c.bf16 %v237, %v237
  %v301 = vpack.c.bf16 %v240, %v240
  %v302 = vpack.c.bf16 %v242, %v242
  %v303 = vpack.c.bf16 %v245, %v245
  %v304 = vpack.c.bf16 %v247, %v247
  %v305 = vpack.c.bf16 %v250, %v250
  %v306 = vpack.c.bf16 %v252, %v252
  %v307 = vpack.c.bf16 %v255, %v255
  %v308 = vpack.c.bf16 %v257, %v257
  %v309 = vpack.c.bf16 %v260, %v260
  %v310 = vpack.c.bf16 %v262, %v262
  %v311 = vpack.c.bf16 %v265, %v265
  %v312 = vpack.c.bf16 %v267, %v267
  %v313 = vpack.c.bf16 %v270, %v270
  %v314 = vpack.c.bf16 %v272, %v272
  %v315 = vpack.c.bf16 %v275, %v275
  %v316 = vpack.c.bf16 %v277, %v277
  %v317 = vpack.c.bf16 %v280, %v280
  %v318 = vpack.c.bf16 %v282, %v282
  %v319 = vpack.c.bf16 %v285, %v285
  %v320 = vpack.c.bf16 %v287, %v287
  %321 = vst [vmem:[#allocation2] sm:$0xf] %v289
  %322 = vst [vmem:[#allocation2 + $0x4] sm:$0xf] %v290
  %323 = vst [vmem:[#allocation2 + $0x8] sm:$0xf] %v291
  %324 = vst [vmem:[#allocation2 + $0xc] sm:$0xf] %v292
  %325 = vst [vmem:[#allocation2 + $0x10] sm:$0xf] %v293
  %326 = vst [vmem:[#allocation2 + $0x14] sm:$0xf] %v294
  %327 = vst [vmem:[#allocation2 + $0x18] sm:$0xf] %v295
  %328 = vst [vmem:[#allocation2 + $0x1c] sm:$0xf] %v296
  %329 = vst [vmem:[#allocation2 + $0x20] sm:$0xf] %v297
  %330 = vst [vmem:[#allocation2 + $0x24] sm:$0xf] %v298
  %331 = vst [vmem:[#allocation2 + $0x28] sm:$0xf] %v299
  %332 = vst [vmem:[#allocation2 + $0x2c] sm:$0xf] %v300
  %333 = vst [vmem:[#allocation2 + $0x30] sm:$0xf] %v301
  %334 = vst [vmem:[#allocation2 + $0x34] sm:$0xf] %v302
  %335 = vst [vmem:[#allocation2 + $0x38] sm:$0xf] %v303
  %336 = vst [vmem:[#allocation2 + $0x3c] sm:$0xf] %v304
  %337 = vst [vmem:[#allocation2 + $0x40] sm:$0xf] %v305
  %338 = vst [vmem:[#allocation2 + $0x44] sm:$0xf] %v306
  %339 = vst [vmem:[#allocation2 + $0x48] sm:$0xf] %v307
  %340 = vst [vmem:[#allocation2 + $0x4c] sm:$0xf] %v308
  %341 = vst [vmem:[#allocation2 + $0x50] sm:$0xf] %v309
  %342 = vst [vmem:[#allocation2 + $0x54] sm:$0xf] %v310
  %343 = vst [vmem:[#allocation2 + $0x58] sm:$0xf] %v311
  %344 = vst [vmem:[#allocation2 + $0x5c] sm:$0xf] %v312
  %345 = vst [vmem:[#allocation2 + $0x60] sm:$0xf] %v313
  %346 = vst [vmem:[#allocation2 + $0x64] sm:$0xf] %v314
  %347 = vst [vmem:[#allocation2 + $0x68] sm:$0xf] %v315
  %348 = vst [vmem:[#allocation2 + $0x6c] sm:$0xf] %v316
  %349 = vst [vmem:[#allocation2 + $0x70] sm:$0xf] %v317
  %350 = vst [vmem:[#allocation2 + $0x74] sm:$0xf] %v318
  %351 = vst [vmem:[#allocation2 + $0x78] sm:$0xf] %v319
  %352 = vst [vmem:[#allocation2 + $0x7c] sm:$0xf] %v320
  %v353 = vld [vmem:[#allocation2] sm:$0xf]
  %v354 = vld [vmem:[#allocation2 + $0x4] sm:$0xf]
  %v355 = vld [vmem:[#allocation2 + $0x8] sm:$0xf]
  %v356 = vld [vmem:[#allocation2 + $0xc] sm:$0xf]
  %v357 = vld [vmem:[#allocation2 + $0x10] sm:$0xf]
  %v358 = vld [vmem:[#allocation2 + $0x14] sm:$0xf]
  %v359 = vld [vmem:[#allocation2 + $0x18] sm:$0xf]
  %v360 = vld [vmem:[#allocation2 + $0x1c] sm:$0xf]
  %v361 = vld [vmem:[#allocation2 + $0x20] sm:$0xf]
  %v362 = vld [vmem:[#allocation2 + $0x24] sm:$0xf]
  %v363 = vld [vmem:[#allocation2 + $0x28] sm:$0xf]
  %v364 = vld [vmem:[#allocation2 + $0x2c] sm:$0xf]
  %v365 = vld [vmem:[#allocation2 + $0x30] sm:$0xf]
  %v366 = vld [vmem:[#allocation2 + $0x34] sm:$0xf]
  %v367 = vld [vmem:[#allocation2 + $0x38] sm:$0xf]
  %v368 = vld [vmem:[#allocation2 + $0x3c] sm:$0xf]
  %v385 = vunpack.c.l.b16 %v18
  %v386 = vunpack.c.l.b16 %v19
  %v387 = vunpack.c.l.b16 %v20
  %v388 = vunpack.c.l.b16 %v21
  %v389 = vunpack.c.l.b16 %v22
  %v390 = vunpack.c.l.b16 %v23
  %v391 = vunpack.c.l.b16 %v24
  %v392 = vunpack.c.l.b16 %v25
  %v393 = vunpack.c.l.b16 %v26
  %v394 = vunpack.c.l.b16 %v27
  %v395 = vunpack.c.l.b16 %v28
  %v396 = vunpack.c.l.b16 %v29
  %v397 = vunpack.c.l.b16 %v30
  %v398 = vunpack.c.l.b16 %v31
  %v399 = vunpack.c.l.b16 %v32
  %v400 = vunpack.c.l.b16 %v33
  %v401 = vpack.c.b16 %v386, %v385
  %v402 = vpack.c.b16 %v388, %v387
  %v403 = vpack.c.b16 %v390, %v389
  %v404 = vpack.c.b16 %v392, %v391
  %v405 = vpack.c.b16 %v394, %v393
  %v406 = vpack.c.b16 %v396, %v395
  %v407 = vpack.c.b16 %v398, %v397
  %v408 = vpack.c.b16 %v400, %v399
  %v433 = vunpack.c.l.b16 %v353
  %v434 = vunpack.c.l.b16 %v354
  %v435 = vunpack.c.l.b16 %v355
  %v436 = vunpack.c.l.b16 %v356
  %v437 = vunpack.c.l.b16 %v357
  %v438 = vunpack.c.l.b16 %v358
  %v439 = vunpack.c.l.b16 %v359
  %v440 = vunpack.c.l.b16 %v360
  %v441 = vunpack.c.l.b16 %v361
  %v442 = vunpack.c.l.b16 %v362
  %v443 = vunpack.c.l.b16 %v363
  %v444 = vunpack.c.l.b16 %v364
  %v445 = vunpack.c.l.b16 %v365
  %v446 = vunpack.c.l.b16 %v366
  %v447 = vunpack.c.l.b16 %v367
  %v448 = vunpack.c.l.b16 %v368
  %v449 = vpack.c.b16 %v434, %v433
  %v450 = vpack.c.b16 %v436, %v435
  %v451 = vpack.c.b16 %v438, %v437
  %v452 = vpack.c.b16 %v440, %v439
  %v453 = vpack.c.b16 %v442, %v441
  %v454 = vpack.c.b16 %v444, %v443
  %v455 = vpack.c.b16 %v446, %v445
  %v456 = vpack.c.b16 %v448, %v447
  %465 = vmatpush.bf16.msra.mxu0 %v456
  %466 = vmatpush.bf16.msra.mxu0 %v455
  %467 = vmatpush.bf16.msra.mxu0 %v454
  %468 = vmatpush.bf16.msra.mxu0 %v453
  %469 = vmatpush.bf16.msra.mxu0 %v452
  %470 = vmatpush.bf16.msra.mxu0 %v451
  %471 = vmatpush.bf16.msra.mxu0 %v450
  %472 = vmatpush.bf16.msra.mxu0 %v449
  %473 = vmatmul.bf16.gmra.mxu0 %v401
  %v474 = vpop.f32.mrf.mxu0
  %v475 = vadd.f32 0.0, %v474
  %v476 = vpop.f32.mrf.mxu0
  %v477 = vadd.f32 0.0, %v476
  %478 = vmatmul.bf16.gmra.mxu0 %v402
  %v479 = vpop.f32.mrf.mxu0
  %v480 = vadd.f32 0.0, %v479
  %v481 = vpop.f32.mrf.mxu0
  %v482 = vadd.f32 0.0, %v481
  %483 = vmatmul.bf16.gmra.mxu0 %v403
  %v484 = vpop.f32.mrf.mxu0
  %v485 = vadd.f32 0.0, %v484
  %v486 = vpop.f32.mrf.mxu0
  %v487 = vadd.f32 0.0, %v486
  %488 = vmatmul.bf16.gmra.mxu0 %v404
  %v489 = vpop.f32.mrf.mxu0
  %v490 = vadd.f32 0.0, %v489
  %v491 = vpop.f32.mrf.mxu0
  %v492 = vadd.f32 0.0, %v491
  %493 = vmatmul.bf16.gmra.mxu0 %v405
  %v494 = vpop.f32.mrf.mxu0
  %v495 = vadd.f32 0.0, %v494
  %v496 = vpop.f32.mrf.mxu0
  %v497 = vadd.f32 0.0, %v496
  %498 = vmatmul.bf16.gmra.mxu0 %v406
  %v499 = vpop.f32.mrf.mxu0
  %v500 = vadd.f32 0.0, %v499
  %v501 = vpop.f32.mrf.mxu0
  %v502 = vadd.f32 0.0, %v501
  %503 = vmatmul.bf16.gmra.mxu0 %v407
  %v504 = vpop.f32.mrf.mxu0
  %v505 = vadd.f32 0.0, %v504
  %v506 = vpop.f32.mrf.mxu0
  %v507 = vadd.f32 0.0, %v506
  %508 = vmatmul.bf16.gmra.mxu0 %v408
  %v509 = vpop.f32.mrf.mxu0
  %v510 = vadd.f32 0.0, %v509
  %v511 = vpop.f32.mrf.mxu0
  %v512 = vadd.f32 0.0, %v511
  %513 = vdwg.mxu0
  %v514 = vmax.f32 %v475, 0.0
  %v515 = vmax.f32 %v477, 0.0
  %v516 = vmax.f32 %v480, 0.0
  %v517 = vmax.f32 %v482, 0.0
  %v518 = vmax.f32 %v485, 0.0
  %v519 = vmax.f32 %v487, 0.0
  %v520 = vmax.f32 %v490, 0.0
  %v521 = vmax.f32 %v492, 0.0
  %v522 = vmax.f32 %v495, 0.0
  %v523 = vmax.f32 %v497, 0.0
  %v524 = vmax.f32 %v500, 0.0
  %v525 = vmax.f32 %v502, 0.0
  %v526 = vmax.f32 %v505, 0.0
  %v527 = vmax.f32 %v507, 0.0
  %v528 = vmax.f32 %v510, 0.0
  %v529 = vmax.f32 %v512, 0.0
  %v530 = vpack.c.bf16 %v514, %v514
  %v531 = vpack.c.bf16 %v515, %v515
  %v532 = vpack.c.bf16 %v516, %v516
  %v533 = vpack.c.bf16 %v517, %v517
  %v534 = vpack.c.bf16 %v518, %v518
  %v535 = vpack.c.bf16 %v519, %v519
  %v536 = vpack.c.bf16 %v520, %v520
  %v537 = vpack.c.bf16 %v521, %v521
  %v538 = vpack.c.bf16 %v522, %v522
  %v539 = vpack.c.bf16 %v523, %v523
  %v540 = vpack.c.bf16 %v524, %v524
  %v541 = vpack.c.bf16 %v525, %v525
  %v542 = vpack.c.bf16 %v526, %v526
  %v543 = vpack.c.bf16 %v527, %v527
  %v544 = vpack.c.bf16 %v528, %v528
  %v545 = vpack.c.bf16 %v529, %v529
  %546 = vst [vmem:[#allocation2] sm:$0xf] %v530
  %547 = vst [vmem:[#allocation2 + $0x4] sm:$0xf] %v531
  %548 = vst [vmem:[#allocation2 + $0x8] sm:$0xf] %v532
  %549 = vst [vmem:[#allocation2 + $0xc] sm:$0xf] %v533
  %550 = vst [vmem:[#allocation2 + $0x10] sm:$0xf] %v534
  %551 = vst [vmem:[#allocation2 + $0x14] sm:$0xf] %v535
  %552 = vst [vmem:[#allocation2 + $0x18] sm:$0xf] %v536
  %553 = vst [vmem:[#allocation2 + $0x1c] sm:$0xf] %v537
  %554 = vst [vmem:[#allocation2 + $0x20] sm:$0xf] %v538
  %555 = vst [vmem:[#allocation2 + $0x24] sm:$0xf] %v539
  %556 = vst [vmem:[#allocation2 + $0x28] sm:$0xf] %v540
  %557 = vst [vmem:[#allocation2 + $0x2c] sm:$0xf] %v541
  %558 = vst [vmem:[#allocation2 + $0x30] sm:$0xf] %v542
  %559 = vst [vmem:[#allocation2 + $0x34] sm:$0xf] %v543
  %560 = vst [vmem:[#allocation2 + $0x38] sm:$0xf] %v544
  %561 = vst [vmem:[#allocation2 + $0x3c] sm:$0xf] %v545
  %s562 = scalar_lea.vmem [#allocation2], 64
  %v563 = vld [vmem:[%s562] sm:$0xf]
  %v564 = vld [vmem:[%s562 + $0x4] sm:$0xf]
  %v565 = vld [vmem:[%s562 + $0x8] sm:$0xf]
  %v566 = vld [vmem:[%s562 + $0xc] sm:$0xf]
  %v567 = vld [vmem:[%s562 + $0x10] sm:$0xf]
  %v568 = vld [vmem:[%s562 + $0x14] sm:$0xf]
  %v569 = vld [vmem:[%s562 + $0x18] sm:$0xf]
  %v570 = vld [vmem:[%s562 + $0x1c] sm:$0xf]
  %v571 = vld [vmem:[%s562 + $0x20] sm:$0xf]
  %v572 = vld [vmem:[%s562 + $0x24] sm:$0xf]
  %v573 = vld [vmem:[%s562 + $0x28] sm:$0xf]
  %v574 = vld [vmem:[%s562 + $0x2c] sm:$0xf]
  %v575 = vld [vmem:[%s562 + $0x30] sm:$0xf]
  %v576 = vld [vmem:[%s562 + $0x34] sm:$0xf]
  %v577 = vld [vmem:[%s562 + $0x38] sm:$0xf]
  %v578 = vld [vmem:[%s562 + $0x3c] sm:$0xf]
  %v595 = vunpack.c.l.b16 %v563
  %v596 = vunpack.c.l.b16 %v564
  %v597 = vunpack.c.l.b16 %v565
  %v598 = vunpack.c.l.b16 %v566
  %v599 = vunpack.c.l.b16 %v567
  %v600 = vunpack.c.l.b16 %v568
  %v601 = vunpack.c.l.b16 %v569
  %v602 = vunpack.c.l.b16 %v570
  %v603 = vunpack.c.l.b16 %v571
  %v604 = vunpack.c.l.b16 %v572
  %v605 = vunpack.c.l.b16 %v573
  %v606 = vunpack.c.l.b16 %v574
  %v607 = vunpack.c.l.b16 %v575
  %v608 = vunpack.c.l.b16 %v576
  %v609 = vunpack.c.l.b16 %v577
  %v610 = vunpack.c.l.b16 %v578
  %v611 = vpack.c.b16 %v596, %v595
  %v612 = vpack.c.b16 %v598, %v597
  %v613 = vpack.c.b16 %v600, %v599
  %v614 = vpack.c.b16 %v602, %v601
  %v615 = vpack.c.b16 %v604, %v603
  %v616 = vpack.c.b16 %v606, %v605
  %v617 = vpack.c.b16 %v608, %v607
  %v618 = vpack.c.b16 %v610, %v609
  %627 = vmatpush.bf16.msra.mxu0 %v618
  %628 = vmatpush.bf16.msra.mxu0 %v617
  %629 = vmatpush.bf16.msra.mxu0 %v616
  %630 = vmatpush.bf16.msra.mxu0 %v615
  %631 = vmatpush.bf16.msra.mxu0 %v614
  %632 = vmatpush.bf16.msra.mxu0 %v613
  %633 = vmatpush.bf16.msra.mxu0 %v612
  %634 = vmatpush.bf16.msra.mxu0 %v611
  %635 = vmatmul.bf16.gmra.mxu0 %v401
  %v636 = vpop.f32.mrf.mxu0
  %v637 = vadd.f32 0.0, %v636
  %v638 = vpop.f32.mrf.mxu0
  %v639 = vadd.f32 0.0, %v638
  %640 = vmatmul.bf16.gmra.mxu0 %v402
  %v641 = vpop.f32.mrf.mxu0
  %v642 = vadd.f32 0.0, %v641
  %v643 = vpop.f32.mrf.mxu0
  %v644 = vadd.f32 0.0, %v643
  %645 = vmatmul.bf16.gmra.mxu0 %v403
  %v646 = vpop.f32.mrf.mxu0
  %v647 = vadd.f32 0.0, %v646
  %v648 = vpop.f32.mrf.mxu0
  %v649 = vadd.f32 0.0, %v648
  %650 = vmatmul.bf16.gmra.mxu0 %v404
  %v651 = vpop.f32.mrf.mxu0
  %v652 = vadd.f32 0.0, %v651
  %v653 = vpop.f32.mrf.mxu0
  %v654 = vadd.f32 0.0, %v653
  %655 = vmatmul.bf16.gmra.mxu0 %v405
  %v656 = vpop.f32.mrf.mxu0
  %v657 = vadd.f32 0.0, %v656
  %v658 = vpop.f32.mrf.mxu0
  %v659 = vadd.f32 0.0, %v658
  %660 = vmatmul.bf16.gmra.mxu0 %v406
  %v661 = vpop.f32.mrf.mxu0
  %v662 = vadd.f32 0.0, %v661
  %v663 = vpop.f32.mrf.mxu0
  %v664 = vadd.f32 0.0, %v663
  %665 = vmatmul.bf16.gmra.mxu0 %v407
  %v666 = vpop.f32.mrf.mxu0
  %v667 = vadd.f32 0.0, %v666
  %v668 = vpop.f32.mrf.mxu0
  %v669 = vadd.f32 0.0, %v668
  %670 = vmatmul.bf16.gmra.mxu0 %v408
  %v671 = vpop.f32.mrf.mxu0
  %v672 = vadd.f32 0.0, %v671
  %v673 = vpop.f32.mrf.mxu0
  %v674 = vadd.f32 0.0, %v673
  %675 = vdwg.mxu0
  %v676 = vmax.f32 %v637, 0.0
  %v677 = vmax.f32 %v639, 0.0
  %v678 = vmax.f32 %v642, 0.0
  %v679 = vmax.f32 %v644, 0.0
  %v680 = vmax.f32 %v647, 0.0
  %v681 = vmax.f32 %v649, 0.0
  %v682 = vmax.f32 %v652, 0.0
  %v683 = vmax.f32 %v654, 0.0
  %v684 = vmax.f32 %v657, 0.0
  %v685 = vmax.f32 %v659, 0.0
  %v686 = vmax.f32 %v662, 0.0
  %v687 = vmax.f32 %v664, 0.0
  %v688 = vmax.f32 %v667, 0.0
  %v689 = vmax.f32 %v669, 0.0
  %v690 = vmax.f32 %v672, 0.0
  %v691 = vmax.f32 %v674, 0.0
  %v692 = vpack.c.bf16 %v676, %v676
  %v693 = vpack.c.bf16 %v677, %v677
  %v694 = vpack.c.bf16 %v678, %v678
  %v695 = vpack.c.bf16 %v679, %v679
  %v696 = vpack.c.bf16 %v680, %v680
  %v697 = vpack.c.bf16 %v681, %v681
  %v698 = vpack.c.bf16 %v682, %v682
  %v699 = vpack.c.bf16 %v683, %v683
  %v700 = vpack.c.bf16 %v684, %v684
  %v701 = vpack.c.bf16 %v685, %v685
  %v702 = vpack.c.bf16 %v686, %v686
  %v703 = vpack.c.bf16 %v687, %v687
  %v704 = vpack.c.bf16 %v688, %v688
  %v705 = vpack.c.bf16 %v689, %v689
  %v706 = vpack.c.bf16 %v690, %v690
  %v707 = vpack.c.bf16 %v691, %v691
  %708 = vst [vmem:[%s562] sm:$0xf] %v692
  %709 = vst [vmem:[%s562 + $0x4] sm:$0xf] %v693
  %710 = vst [vmem:[%s562 + $0x8] sm:$0xf] %v694
  %711 = vst [vmem:[%s562 + $0xc] sm:$0xf] %v695
  %712 = vst [vmem:[%s562 + $0x10] sm:$0xf] %v696
  %713 = vst [vmem:[%s562 + $0x14] sm:$0xf] %v697
  %714 = vst [vmem:[%s562 + $0x18] sm:$0xf] %v698
  %715 = vst [vmem:[%s562 + $0x1c] sm:$0xf] %v699
  %716 = vst [vmem:[%s562 + $0x20] sm:$0xf] %v700
  %717 = vst [vmem:[%s562 + $0x24] sm:$0xf] %v701
  %718 = vst [vmem:[%s562 + $0x28] sm:$0xf] %v702
  %719 = vst [vmem:[%s562 + $0x2c] sm:$0xf] %v703
  %720 = vst [vmem:[%s562 + $0x30] sm:$0xf] %v704
  %721 = vst [vmem:[%s562 + $0x34] sm:$0xf] %v705
  %722 = vst [vmem:[%s562 + $0x38] sm:$0xf] %v706
  %723 = vst [vmem:[%s562 + $0x3c] sm:$0xf] %v707
  %v724 = vld [vmem:[#allocation2] sm:$0xf]
  %v725 = vld [vmem:[#allocation2 + $0x4] sm:$0xf]
  %v726 = vld [vmem:[#allocation2 + $0x8] sm:$0xf]
  %v727 = vld [vmem:[#allocation2 + $0xc] sm:$0xf]
  %v728 = vld [vmem:[#allocation2 + $0x10] sm:$0xf]
  %v729 = vld [vmem:[#allocation2 + $0x14] sm:$0xf]
  %v730 = vld [vmem:[#allocation2 + $0x18] sm:$0xf]
  %v731 = vld [vmem:[#allocation2 + $0x1c] sm:$0xf]
  %v732 = vld [vmem:[#allocation2 + $0x20] sm:$0xf]
  %v733 = vld [vmem:[#allocation2 + $0x24] sm:$0xf]
  %v734 = vld [vmem:[#allocation2 + $0x28] sm:$0xf]
  %v735 = vld [vmem:[#allocation2 + $0x2c] sm:$0xf]
  %v736 = vld [vmem:[#allocation2 + $0x30] sm:$0xf]
  %v737 = vld [vmem:[#allocation2 + $0x34] sm:$0xf]
  %v738 = vld [vmem:[#allocation2 + $0x38] sm:$0xf]
  %v739 = vld [vmem:[#allocation2 + $0x3c] sm:$0xf]
  %v740 = vld [vmem:[#allocation2 + $0x40] sm:$0xf]
  %v741 = vld [vmem:[#allocation2 + $0x44] sm:$0xf]
  %v742 = vld [vmem:[#allocation2 + $0x48] sm:$0xf]
  %v743 = vld [vmem:[#allocation2 + $0x4c] sm:$0xf]
  %v744 = vld [vmem:[#allocation2 + $0x50] sm:$0xf]
  %v745 = vld [vmem:[#allocation2 + $0x54] sm:$0xf]
  %v746 = vld [vmem:[#allocation2 + $0x58] sm:$0xf]
  %v747 = vld [vmem:[#allocation2 + $0x5c] sm:$0xf]
  %v748 = vld [vmem:[#allocation2 + $0x60] sm:$0xf]
  %v749 = vld [vmem:[#allocation2 + $0x64] sm:$0xf]
  %v750 = vld [vmem:[#allocation2 + $0x68] sm:$0xf]
  %v751 = vld [vmem:[#allocation2 + $0x6c] sm:$0xf]
  %v752 = vld [vmem:[#allocation2 + $0x70] sm:$0xf]
  %v753 = vld [vmem:[#allocation2 + $0x74] sm:$0xf]
  %v754 = vld [vmem:[#allocation2 + $0x78] sm:$0xf]
  %v755 = vld [vmem:[#allocation2 + $0x7c] sm:$0xf]
  %v756 = vld [vmem:[%s2] sm:$0xf]
  %v757 = vld [vmem:[%s2 + $0x4] sm:$0xf]
  %v758 = vld [vmem:[%s2 + $0x8] sm:$0xf]
  %v759 = vld [vmem:[%s2 + $0xc] sm:$0xf]
  %v760 = vld [vmem:[%s2 + $0x10] sm:$0xf]
  %v761 = vld [vmem:[%s2 + $0x14] sm:$0xf]
  %v762 = vld [vmem:[%s2 + $0x18] sm:$0xf]
  %v763 = vld [vmem:[%s2 + $0x1c] sm:$0xf]
  %v764 = vld [vmem:[%s2 + $0x20] sm:$0xf]
  %v765 = vld [vmem:[%s2 + $0x24] sm:$0xf]
  %v766 = vld [vmem:[%s2 + $0x28] sm:$0xf]
  %v767 = vld [vmem:[%s2 + $0x2c] sm:$0xf]
  %v768 = vld [vmem:[%s2 + $0x30] sm:$0xf]
  %v769 = vld [vmem:[%s2 + $0x34] sm:$0xf]
  %v770 = vld [vmem:[%s2 + $0x38] sm:$0xf]
  %v771 = vld [vmem:[%s2 + $0x3c] sm:$0xf]
  %v804 = vunpack.c.l.b16 %v724
  %v805 = vunpack.c.l.b16 %v725
  %v806 = vunpack.c.l.b16 %v726
  %v807 = vunpack.c.l.b16 %v727
  %v808 = vunpack.c.l.b16 %v728
  %v809 = vunpack.c.l.b16 %v729
  %v810 = vunpack.c.l.b16 %v730
  %v811 = vunpack.c.l.b16 %v731
  %v812 = vunpack.c.l.b16 %v732
  %v813 = vunpack.c.l.b16 %v733
  %v814 = vunpack.c.l.b16 %v734
  %v815 = vunpack.c.l.b16 %v735
  %v816 = vunpack.c.l.b16 %v736
  %v817 = vunpack.c.l.b16 %v737
  %v818 = vunpack.c.l.b16 %v738
  %v819 = vunpack.c.l.b16 %v739
  %v820 = vunpack.c.l.b16 %v740
  %v821 = vunpack.c.l.b16 %v741
  %v822 = vunpack.c.l.b16 %v742
  %v823 = vunpack.c.l.b16 %v743
  %v824 = vunpack.c.l.b16 %v744
  %v825 = vunpack.c.l.b16 %v745
  %v826 = vunpack.c.l.b16 %v746
  %v827 = vunpack.c.l.b16 %v747
  %v828 = vunpack.c.l.b16 %v748
  %v829 = vunpack.c.l.b16 %v749
  %v830 = vunpack.c.l.b16 %v750
  %v831 = vunpack.c.l.b16 %v751
  %v832 = vunpack.c.l.b16 %v752
  %v833 = vunpack.c.l.b16 %v753
  %v834 = vunpack.c.l.b16 %v754
  %v835 = vunpack.c.l.b16 %v755
  %v836 = vpack.c.b16 %v805, %v804
  %v837 = vpack.c.b16 %v807, %v806
  %v838 = vpack.c.b16 %v809, %v808
  %v839 = vpack.c.b16 %v811, %v810
  %v840 = vpack.c.b16 %v813, %v812
  %v841 = vpack.c.b16 %v815, %v814
  %v842 = vpack.c.b16 %v817, %v816
  %v843 = vpack.c.b16 %v819, %v818
  %v844 = vpack.c.b16 %v821, %v820
  %v845 = vpack.c.b16 %v823, %v822
  %v846 = vpack.c.b16 %v825, %v824
  %v847 = vpack.c.b16 %v827, %v826
  %v848 = vpack.c.b16 %v829, %v828
  %v849 = vpack.c.b16 %v831, %v830
  %v850 = vpack.c.b16 %v833, %v832
  %v851 = vpack.c.b16 %v835, %v834
  %v884 = vunpack.c.l.b16 %v756
  %v885 = vunpack.c.l.b16 %v757
  %v886 = vunpack.c.l.b16 %v758
  %v887 = vunpack.c.l.b16 %v759
  %v888 = vunpack.c.l.b16 %v760
  %v889 = vunpack.c.l.b16 %v761
  %v890 = vunpack.c.l.b16 %v762
  %v891 = vunpack.c.l.b16 %v763
  %v892 = vunpack.c.l.b16 %v764
  %v893 = vunpack.c.l.b16 %v765
  %v894 = vunpack.c.l.b16 %v766
  %v895 = vunpack.c.l.b16 %v767
  %v896 = vunpack.c.l.b16 %v768
  %v897 = vunpack.c.l.b16 %v769
  %v898 = vunpack.c.l.b16 %v770
  %v899 = vunpack.c.l.b16 %v771
  %v900 = vpack.c.b16 %v885, %v884
  %v901 = vpack.c.b16 %v887, %v886
  %v902 = vpack.c.b16 %v889, %v888
  %v903 = vpack.c.b16 %v891, %v890
  %v904 = vpack.c.b16 %v893, %v892
  %v905 = vpack.c.b16 %v895, %v894
  %v906 = vpack.c.b16 %v897, %v896
  %v907 = vpack.c.b16 %v899, %v898
  %916 = vmatpush.bf16.msra.mxu0 %v907
  %917 = vmatpush.bf16.msra.mxu0 %v906
  %918 = vmatpush.bf16.msra.mxu0 %v905
  %919 = vmatpush.bf16.msra.mxu0 %v904
  %920 = vmatpush.bf16.msra.mxu0 %v903
  %921 = vmatpush.bf16.msra.mxu0 %v902
  %922 = vmatpush.bf16.msra.mxu0 %v901
  %923 = vmatpush.bf16.msra.mxu0 %v900
  %924 = vmatmul.bf16.gmra.mxu0 %v836
  %v925 = vpop.f32.mrf.mxu0
  %v926 = vadd.f32 0.0, %v925
  %v927 = vpop.f32.mrf.mxu0
  %v928 = vadd.f32 0.0, %v927
  %929 = vmatmul.bf16.gmra.mxu0 %v837
  %v930 = vpop.f32.mrf.mxu0
  %v931 = vadd.f32 0.0, %v930
  %v932 = vpop.f32.mrf.mxu0
  %v933 = vadd.f32 0.0, %v932
  %934 = vmatmul.bf16.gmra.mxu0 %v838
  %v935 = vpop.f32.mrf.mxu0
  %v936 = vadd.f32 0.0, %v935
  %v937 = vpop.f32.mrf.mxu0
  %v938 = vadd.f32 0.0, %v937
  %939 = vmatmul.bf16.gmra.mxu0 %v839
  %v940 = vpop.f32.mrf.mxu0
  %v941 = vadd.f32 0.0, %v940
  %v942 = vpop.f32.mrf.mxu0
  %v943 = vadd.f32 0.0, %v942
  %944 = vmatmul.bf16.gmra.mxu0 %v840
  %v945 = vpop.f32.mrf.mxu0
  %v946 = vadd.f32 0.0, %v945
  %v947 = vpop.f32.mrf.mxu0
  %v948 = vadd.f32 0.0, %v947
  %949 = vmatmul.bf16.gmra.mxu0 %v841
  %v950 = vpop.f32.mrf.mxu0
  %v951 = vadd.f32 0.0, %v950
  %v952 = vpop.f32.mrf.mxu0
  %v953 = vadd.f32 0.0, %v952
  %954 = vmatmul.bf16.gmra.mxu0 %v842
  %v955 = vpop.f32.mrf.mxu0
  %v956 = vadd.f32 0.0, %v955
  %v957 = vpop.f32.mrf.mxu0
  %v958 = vadd.f32 0.0, %v957
  %959 = vmatmul.bf16.gmra.mxu0 %v843
  %v960 = vpop.f32.mrf.mxu0
  %v961 = vadd.f32 0.0, %v960
  %v962 = vpop.f32.mrf.mxu0
  %v963 = vadd.f32 0.0, %v962
  %964 = vmatmul.bf16.gmra.mxu0 %v844
  %v965 = vpop.f32.mrf.mxu0
  %v966 = vadd.f32 0.0, %v965
  %v967 = vpop.f32.mrf.mxu0
  %v968 = vadd.f32 0.0, %v967
  %969 = vmatmul.bf16.gmra.mxu0 %v845
  %v970 = vpop.f32.mrf.mxu0
  %v971 = vadd.f32 0.0, %v970
  %v972 = vpop.f32.mrf.mxu0
  %v973 = vadd.f32 0.0, %v972
  %974 = vmatmul.bf16.gmra.mxu0 %v846
  %v975 = vpop.f32.mrf.mxu0
  %v976 = vadd.f32 0.0, %v975
  %v977 = vpop.f32.mrf.mxu0
  %v978 = vadd.f32 0.0, %v977
  %979 = vmatmul.bf16.gmra.mxu0 %v847
  %v980 = vpop.f32.mrf.mxu0
  %v981 = vadd.f32 0.0, %v980
  %v982 = vpop.f32.mrf.mxu0
  %v983 = vadd.f32 0.0, %v982
  %984 = vmatmul.bf16.gmra.mxu0 %v848
  %v985 = vpop.f32.mrf.mxu0
  %v986 = vadd.f32 0.0, %v985
  %v987 = vpop.f32.mrf.mxu0
  %v988 = vadd.f32 0.0, %v987
  %989 = vmatmul.bf16.gmra.mxu0 %v849
  %v990 = vpop.f32.mrf.mxu0
  %v991 = vadd.f32 0.0, %v990
  %v992 = vpop.f32.mrf.mxu0
  %v993 = vadd.f32 0.0, %v992
  %994 = vmatmul.bf16.gmra.mxu0 %v850
  %v995 = vpop.f32.mrf.mxu0
  %v996 = vadd.f32 0.0, %v995
  %v997 = vpop.f32.mrf.mxu0
  %v998 = vadd.f32 0.0, %v997
  %999 = vmatmul.bf16.gmra.mxu0 %v851
  %v1000 = vpop.f32.mrf.mxu0
  %v1001 = vadd.f32 0.0, %v1000
  %v1002 = vpop.f32.mrf.mxu0
  %v1003 = vadd.f32 0.0, %v1002
  %1004 = vdwg.mxu0
  %v1005 = vpack.c.bf16 %v926, %v926
  %v1006 = vpack.c.bf16 %v928, %v928
  %v1007 = vpack.c.bf16 %v931, %v931
  %v1008 = vpack.c.bf16 %v933, %v933
  %v1009 = vpack.c.bf16 %v936, %v936
  %v1010 = vpack.c.bf16 %v938, %v938
  %v1011 = vpack.c.bf16 %v941, %v941
  %v1012 = vpack.c.bf16 %v943, %v943
  %v1013 = vpack.c.bf16 %v946, %v946
  %v1014 = vpack.c.bf16 %v948, %v948
  %v1015 = vpack.c.bf16 %v951, %v951
  %v1016 = vpack.c.bf16 %v953, %v953
  %v1017 = vpack.c.bf16 %v956, %v956
  %v1018 = vpack.c.bf16 %v958, %v958
  %v1019 = vpack.c.bf16 %v961, %v961
  %v1020 = vpack.c.bf16 %v963, %v963
  %v1021 = vpack.c.bf16 %v966, %v966
  %v1022 = vpack.c.bf16 %v968, %v968
  %v1023 = vpack.c.bf16 %v971, %v971
  %v1024 = vpack.c.bf16 %v973, %v973
  %v1025 = vpack.c.bf16 %v976, %v976
  %v1026 = vpack.c.bf16 %v978, %v978
  %v1027 = vpack.c.bf16 %v981, %v981
  %v1028 = vpack.c.bf16 %v983, %v983
  %v1029 = vpack.c.bf16 %v986, %v986
  %v1030 = vpack.c.bf16 %v988, %v988
  %v1031 = vpack.c.bf16 %v991, %v991
  %v1032 = vpack.c.bf16 %v993, %v993
  %v1033 = vpack.c.bf16 %v996, %v996
  %v1034 = vpack.c.bf16 %v998, %v998
  %v1035 = vpack.c.bf16 %v1001, %v1001
  %v1036 = vpack.c.bf16 %v1003, %v1003
  %1037 = vst [vmem:[#allocation2] sm:$0xf] %v1005
  %1038 = vst [vmem:[#allocation2 + $0x4] sm:$0xf] %v1006
  %1039 = vst [vmem:[#allocation2 + $0x8] sm:$0xf] %v1007
  %1040 = vst [vmem:[#allocation2 + $0xc] sm:$0xf] %v1008
  %1041 = vst [vmem:[#allocation2 + $0x10] sm:$0xf] %v1009
  %1042 = vst [vmem:[#allocation2 + $0x14] sm:$0xf] %v1010
  %1043 = vst [vmem:[#allocation2 + $0x18] sm:$0xf] %v1011
  %1044 = vst [vmem:[#allocation2 + $0x1c] sm:$0xf] %v1012
  %1045 = vst [vmem:[#allocation2 + $0x20] sm:$0xf] %v1013
  %1046 = vst [vmem:[#allocation2 + $0x24] sm:$0xf] %v1014
  %1047 = vst [vmem:[#allocation2 + $0x28] sm:$0xf] %v1015
  %1048 = vst [vmem:[#allocation2 + $0x2c] sm:$0xf] %v1016
  %1049 = vst [vmem:[#allocation2 + $0x30] sm:$0xf] %v1017
  %1050 = vst [vmem:[#allocation2 + $0x34] sm:$0xf] %v1018
  %1051 = vst [vmem:[#allocation2 + $0x38] sm:$0xf] %v1019
  %1052 = vst [vmem:[#allocation2 + $0x3c] sm:$0xf] %v1020
  %1053 = vst [vmem:[#allocation2 + $0x40] sm:$0xf] %v1021
  %1054 = vst [vmem:[#allocation2 + $0x44] sm:$0xf] %v1022
  %1055 = vst [vmem:[#allocation2 + $0x48] sm:$0xf] %v1023
  %1056 = vst [vmem:[#allocation2 + $0x4c] sm:$0xf] %v1024
  %1057 = vst [vmem:[#allocation2 + $0x50] sm:$0xf] %v1025
  %1058 = vst [vmem:[#allocation2 + $0x54] sm:$0xf] %v1026
  %1059 = vst [vmem:[#allocation2 + $0x58] sm:$0xf] %v1027
  %1060 = vst [vmem:[#allocation2 + $0x5c] sm:$0xf] %v1028
  %1061 = vst [vmem:[#allocation2 + $0x60] sm:$0xf] %v1029
  %1062 = vst [vmem:[#allocation2 + $0x64] sm:$0xf] %v1030
  %1063 = vst [vmem:[#allocation2 + $0x68] sm:$0xf] %v1031
  %1064 = vst [vmem:[#allocation2 + $0x6c] sm:$0xf] %v1032
  %1065 = vst [vmem:[#allocation2 + $0x70] sm:$0xf] %v1033
  %1066 = vst [vmem:[#allocation2 + $0x74] sm:$0xf] %v1034
  %1067 = vst [vmem:[#allocation2 + $0x78] sm:$0xf] %v1035
  %1068 = vst [vmem:[#allocation2 + $0x7c] sm:$0xf] %v1036
  %v1069 = vld [vmem:[#allocation2] sm:$0xf]
  %v1070 = vld [vmem:[#allocation2 + $0x4] sm:$0xf]
  %v1071 = vld [vmem:[#allocation2 + $0x8] sm:$0xf]
  %v1072 = vld [vmem:[#allocation2 + $0xc] sm:$0xf]
  %v1073 = vld [vmem:[#allocation2 + $0x10] sm:$0xf]
  %v1074 = vld [vmem:[#allocation2 + $0x14] sm:$0xf]
  %v1075 = vld [vmem:[#allocation2 + $0x18] sm:$0xf]
  %v1076 = vld [vmem:[#allocation2 + $0x1c] sm:$0xf]
  %v1077 = vld [vmem:[#allocation2 + $0x20] sm:$0xf]
  %v1078 = vld [vmem:[#allocation2 + $0x24] sm:$0xf]
  %v1079 = vld [vmem:[#allocation2 + $0x28] sm:$0xf]
  %v1080 = vld [vmem:[#allocation2 + $0x2c] sm:$0xf]
  %v1081 = vld [vmem:[#allocation2 + $0x30] sm:$0xf]
  %v1082 = vld [vmem:[#allocation2 + $0x34] sm:$0xf]
  %v1083 = vld [vmem:[#allocation2 + $0x38] sm:$0xf]
  %v1084 = vld [vmem:[#allocation2 + $0x3c] sm:$0xf]
  %v1101 = vunpack.c.l.b16 %v1069
  %v1102 = vunpack.c.l.b16 %v1070
  %v1103 = vunpack.c.l.b16 %v1071
  %v1104 = vunpack.c.l.b16 %v1072
  %v1105 = vunpack.c.l.b16 %v1073
  %v1106 = vunpack.c.l.b16 %v1074
  %v1107 = vunpack.c.l.b16 %v1075
  %v1108 = vunpack.c.l.b16 %v1076
  %v1109 = vunpack.c.l.b16 %v1077
  %v1110 = vunpack.c.l.b16 %v1078
  %v1111 = vunpack.c.l.b16 %v1079
  %v1112 = vunpack.c.l.b16 %v1080
  %v1113 = vunpack.c.l.b16 %v1081
  %v1114 = vunpack.c.l.b16 %v1082
  %v1115 = vunpack.c.l.b16 %v1083
  %v1116 = vunpack.c.l.b16 %v1084
  %v1117 = vpack.c.b16 %v1102, %v1101
  %v1118 = vpack.c.b16 %v1104, %v1103
  %v1119 = vpack.c.b16 %v1106, %v1105
  %v1120 = vpack.c.b16 %v1108, %v1107
  %v1121 = vpack.c.b16 %v1110, %v1109
  %v1122 = vpack.c.b16 %v1112, %v1111
  %v1123 = vpack.c.b16 %v1114, %v1113
  %v1124 = vpack.c.b16 %v1116, %v1115
  %1133 = vmatpush.bf16.msra.mxu0 %v1124
  %1134 = vmatpush.bf16.msra.mxu0 %v1123
  %1135 = vmatpush.bf16.msra.mxu0 %v1122
  %1136 = vmatpush.bf16.msra.mxu0 %v1121
  %1137 = vmatpush.bf16.msra.mxu0 %v1120
  %1138 = vmatpush.bf16.msra.mxu0 %v1119
  %1139 = vmatpush.bf16.msra.mxu0 %v1118
  %1140 = vmatpush.bf16.msra.mxu0 %v1117
  %1141 = vmatmul.bf16.gmra.mxu0 %v401
  %v1142 = vpop.f32.mrf.mxu0
  %v1143 = vadd.f32 0.0, %v1142
  %v1144 = vpop.f32.mrf.mxu0
  %v1145 = vadd.f32 0.0, %v1144
  %1146 = vmatmul.bf16.gmra.mxu0 %v402
  %v1147 = vpop.f32.mrf.mxu0
  %v1148 = vadd.f32 0.0, %v1147
  %v1149 = vpop.f32.mrf.mxu0
  %v1150 = vadd.f32 0.0, %v1149
  %1151 = vmatmul.bf16.gmra.mxu0 %v403
  %v1152 = vpop.f32.mrf.mxu0
  %v1153 = vadd.f32 0.0, %v1152
  %v1154 = vpop.f32.mrf.mxu0
  %v1155 = vadd.f32 0.0, %v1154
  %1156 = vmatmul.bf16.gmra.mxu0 %v404
  %v1157 = vpop.f32.mrf.mxu0
  %v1158 = vadd.f32 0.0, %v1157
  %v1159 = vpop.f32.mrf.mxu0
  %v1160 = vadd.f32 0.0, %v1159
  %1161 = vmatmul.bf16.gmra.mxu0 %v405
  %v1162 = vpop.f32.mrf.mxu0
  %v1163 = vadd.f32 0.0, %v1162
  %v1164 = vpop.f32.mrf.mxu0
  %v1165 = vadd.f32 0.0, %v1164
  %1166 = vmatmul.bf16.gmra.mxu0 %v406
  %v1167 = vpop.f32.mrf.mxu0
  %v1168 = vadd.f32 0.0, %v1167
  %v1169 = vpop.f32.mrf.mxu0
  %v1170 = vadd.f32 0.0, %v1169
  %1171 = vmatmul.bf16.gmra.mxu0 %v407
  %v1172 = vpop.f32.mrf.mxu0
  %v1173 = vadd.f32 0.0, %v1172
  %v1174 = vpop.f32.mrf.mxu0
  %v1175 = vadd.f32 0.0, %v1174
  %1176 = vmatmul.bf16.gmra.mxu0 %v408
  %v1177 = vpop.f32.mrf.mxu0
  %v1178 = vadd.f32 0.0, %v1177
  %v1179 = vpop.f32.mrf.mxu0
  %v1180 = vadd.f32 0.0, %v1179
  %1181 = vdwg.mxu0
  %1182 = vst [vmem:[%s4] sm:$0xff] %v1143
  %1183 = vst [vmem:[%s4 + $0x8] sm:$0xff] %v1145
  %1184 = vst [vmem:[%s4 + $0x10] sm:$0xff] %v1148
  %1185 = vst [vmem:[%s4 + $0x18] sm:$0xff] %v1150
  %1186 = vst [vmem:[%s4 + $0x20] sm:$0xff] %v1153
  %1187 = vst [vmem:[%s4 + $0x28] sm:$0xff] %v1155
  %1188 = vst [vmem:[%s4 + $0x30] sm:$0xff] %v1158
  %1189 = vst [vmem:[%s4 + $0x38] sm:$0xff] %v1160
  %1190 = vst [vmem:[%s4 + $0x40] sm:$0xff] %v1163
  %1191 = vst [vmem:[%s4 + $0x48] sm:$0xff] %v1165
  %1192 = vst [vmem:[%s4 + $0x50] sm:$0xff] %v1168
  %1193 = vst [vmem:[%s4 + $0x58] sm:$0xff] %v1170
  %1194 = vst [vmem:[%s4 + $0x60] sm:$0xff] %v1173
  %1195 = vst [vmem:[%s4 + $0x68] sm:$0xff] %v1175
  %1196 = vst [vmem:[%s4 + $0x70] sm:$0xff] %v1178
  %1197 = vst [vmem:[%s4 + $0x78] sm:$0xff] %v1180
  %v1198 = vld [vmem:[%s562] sm:$0xf]
  %v1199 = vld [vmem:[%s562 + $0x4] sm:$0xf]
  %v1200 = vld [vmem:[%s562 + $0x8] sm:$0xf]
  %v1201 = vld [vmem:[%s562 + $0xc] sm:$0xf]
  %v1202 = vld [vmem:[%s562 + $0x10] sm:$0xf]
  %v1203 = vld [vmem:[%s562 + $0x14] sm:$0xf]
  %v1204 = vld [vmem:[%s562 + $0x18] sm:$0xf]
  %v1205 = vld [vmem:[%s562 + $0x1c] sm:$0xf]
  %v1206 = vld [vmem:[%s562 + $0x20] sm:$0xf]
  %v1207 = vld [vmem:[%s562 + $0x24] sm:$0xf]
  %v1208 = vld [vmem:[%s562 + $0x28] sm:$0xf]
  %v1209 = vld [vmem:[%s562 + $0x2c] sm:$0xf]
  %v1210 = vld [vmem:[%s562 + $0x30] sm:$0xf]
  %v1211 = vld [vmem:[%s562 + $0x34] sm:$0xf]
  %v1212 = vld [vmem:[%s562 + $0x38] sm:$0xf]
  %v1213 = vld [vmem:[%s562 + $0x3c] sm:$0xf]
  %v1230 = vunpack.c.l.b16 %v1198
  %v1231 = vunpack.c.l.b16 %v1199
  %v1232 = vunpack.c.l.b16 %v1200
  %v1233 = vunpack.c.l.b16 %v1201
  %v1234 = vunpack.c.l.b16 %v1202
  %v1235 = vunpack.c.l.b16 %v1203
  %v1236 = vunpack.c.l.b16 %v1204
  %v1237 = vunpack.c.l.b16 %v1205
  %v1238 = vunpack.c.l.b16 %v1206
  %v1239 = vunpack.c.l.b16 %v1207
  %v1240 = vunpack.c.l.b16 %v1208
  %v1241 = vunpack.c.l.b16 %v1209
  %v1242 = vunpack.c.l.b16 %v1210
  %v1243 = vunpack.c.l.b16 %v1211
  %v1244 = vunpack.c.l.b16 %v1212
  %v1245 = vunpack.c.l.b16 %v1213
  %v1246 = vpack.c.b16 %v1231, %v1230
  %v1247 = vpack.c.b16 %v1233, %v1232
  %v1248 = vpack.c.b16 %v1235, %v1234
  %v1249 = vpack.c.b16 %v1237, %v1236
  %v1250 = vpack.c.b16 %v1239, %v1238
  %v1251 = vpack.c.b16 %v1241, %v1240
  %v1252 = vpack.c.b16 %v1243, %v1242
  %v1253 = vpack.c.b16 %v1245, %v1244
  %1262 = vmatpush.bf16.msra.mxu0 %v1253
  %1263 = vmatpush.bf16.msra.mxu0 %v1252
  %1264 = vmatpush.bf16.msra.mxu0 %v1251
  %1265 = vmatpush.bf16.msra.mxu0 %v1250
  %1266 = vmatpush.bf16.msra.mxu0 %v1249
  %1267 = vmatpush.bf16.msra.mxu0 %v1248
  %1268 = vmatpush.bf16.msra.mxu0 %v1247
  %1269 = vmatpush.bf16.msra.mxu0 %v1246
  %1270 = vmatmul.bf16.gmra.mxu0 %v401
  %v1271 = vpop.f32.mrf.mxu0
  %v1272 = vadd.f32 0.0, %v1271
  %v1273 = vpop.f32.mrf.mxu0
  %v1274 = vadd.f32 0.0, %v1273
  %1275 = vmatmul.bf16.gmra.mxu0 %v402
  %v1276 = vpop.f32.mrf.mxu0
  %v1277 = vadd.f32 0.0, %v1276
  %v1278 = vpop.f32.mrf.mxu0
  %v1279 = vadd.f32 0.0, %v1278
  %1280 = vmatmul.bf16.gmra.mxu0 %v403
  %v1281 = vpop.f32.mrf.mxu0
  %v1282 = vadd.f32 0.0, %v1281
  %v1283 = vpop.f32.mrf.mxu0
  %v1284 = vadd.f32 0.0, %v1283
  %1285 = vmatmul.bf16.gmra.mxu0 %v404
  %v1286 = vpop.f32.mrf.mxu0
  %v1287 = vadd.f32 0.0, %v1286
  %v1288 = vpop.f32.mrf.mxu0
  %v1289 = vadd.f32 0.0, %v1288
  %1290 = vmatmul.bf16.gmra.mxu0 %v405
  %v1291 = vpop.f32.mrf.mxu0
  %v1292 = vadd.f32 0.0, %v1291
  %v1293 = vpop.f32.mrf.mxu0
  %v1294 = vadd.f32 0.0, %v1293
  %1295 = vmatmul.bf16.gmra.mxu0 %v406
  %v1296 = vpop.f32.mrf.mxu0
  %v1297 = vadd.f32 0.0, %v1296
  %v1298 = vpop.f32.mrf.mxu0
  %v1299 = vadd.f32 0.0, %v1298
  %1300 = vmatmul.bf16.gmra.mxu0 %v407
  %v1301 = vpop.f32.mrf.mxu0
  %v1302 = vadd.f32 0.0, %v1301
  %v1303 = vpop.f32.mrf.mxu0
  %v1304 = vadd.f32 0.0, %v1303
  %1305 = vmatmul.bf16.gmra.mxu0 %v408
  %v1306 = vpop.f32.mrf.mxu0
  %v1307 = vadd.f32 0.0, %v1306
  %v1308 = vpop.f32.mrf.mxu0
  %v1309 = vadd.f32 0.0, %v1308
  %1310 = vdwg.mxu0
  %s1311 = scalar_lea.vmem %s4, 128
  %1312 = vst [vmem:[%s1311] sm:$0xff] %v1272
  %1313 = vst [vmem:[%s1311 + $0x8] sm:$0xff] %v1274
  %1314 = vst [vmem:[%s1311 + $0x10] sm:$0xff] %v1277
  %1315 = vst [vmem:[%s1311 + $0x18] sm:$0xff] %v1279
  %1316 = vst [vmem:[%s1311 + $0x20] sm:$0xff] %v1282
  %1317 = vst [vmem:[%s1311 + $0x28] sm:$0xff] %v1284
  %1318 = vst [vmem:[%s1311 + $0x30] sm:$0xff] %v1287
  %1319 = vst [vmem:[%s1311 + $0x38] sm:$0xff] %v1289
  %1320 = vst [vmem:[%s1311 + $0x40] sm:$0xff] %v1292
  %1321 = vst [vmem:[%s1311 + $0x48] sm:$0xff] %v1294
  %1322 = vst [vmem:[%s1311 + $0x50] sm:$0xff] %v1297
  %1323 = vst [vmem:[%s1311 + $0x58] sm:$0xff] %v1299
  %1324 = vst [vmem:[%s1311 + $0x60] sm:$0xff] %v1302
  %1325 = vst [vmem:[%s1311 + $0x68] sm:$0xff] %v1304
  %1326 = vst [vmem:[%s1311 + $0x70] sm:$0xff] %v1307
  %1327 = vst [vmem:[%s1311 + $0x78] sm:$0xff] %v1309
  // Predicated region
  $region18: #{_lambda_.1} parent=0 // pred_check
    _
  $region19: #{_lambda_.1} parent=0 // pred_check_branch
    %1329 = sbr.rel (0) target = $region21
  $region20: #{_lambda_.1} parent=0 // pred_region
    _
  $region21: #{_lambda_.1} parent=0 // pred_fallthru
    _
  // Predicated region
  $region22: #{_lambda_.1} parent=0 // pred_check
    _
  $region23: #{_lambda_.1} parent=0 // pred_check_branch
    %1331 = sbr.rel (0) target = $region25
  $region24: #{_lambda_.1} parent=0 // pred_region
    _
  $region25: #{_lambda_.1} parent=0 // pred_fallthru
    _

</llo_original>
